<compile_context>
chip_gen: v6e
topology: v6e:2x2x1
jax: 0.10.0
libtpu: 0.0.40
codegen_flags: <defaults>
</compile_context>

<pallas_src>
import functools

import jax
import jax.numpy as jnp
from jax.experimental import pallas as pl
from jax.experimental.pallas import tpu as pltpu


def _poincare_mf_kernel(vu_ref, vi_ref, bu_ref, bi_ref, scal_ref, out_ref):
    # Embedding blocks arrive gather-native as (TB, D); one XLU transpose each
    # puts the batch on lanes so all downstream math is lane-dense (1, TB).
    vu = jnp.transpose(vu_ref[...].astype(jnp.float32))      # (D, TB)
    vi = jnp.transpose(vi_ref[...].astype(jnp.float32))      # (D, TB)

    # Three sublane reductions per tile -> (1, TB) row vectors.
    au = jnp.sum(vu * vu, axis=0, keepdims=True)             # ||vu||^2
    ai = jnp.sum(vi * vi, axis=0, keepdims=True)             # ||vi||^2
    uv = jnp.sum(vu * vi, axis=0, keepdims=True)             # <vu, vi>

    def _ball_scale(a):
        # transform(transform(x)) = c * x with
        #   s1 = 1 + sqrt(1 + a),  c = 1 / (s1 * (1 + sqrt(1 + a / s1^2)))
        s1 = 1.0 + jnp.sqrt(1.0 + a)
        inv_s1 = pl.reciprocal(s1, approx=False)
        s2 = 1.0 + jnp.sqrt(1.0 + a * inv_s1 * inv_s1)
        return inv_s1 * pl.reciprocal(s2, approx=False)

    cu = _ball_scale(au)                                     # (1, TB)
    ci = _ball_scale(ai)

    nu2 = cu * cu * au                                       # ||pu||^2
    ni2 = ci * ci * ai                                       # ||pi||^2
    d2 = jnp.maximum(nu2 + ni2 - 2.0 * (cu * ci) * uv, 0.0)  # ||pu - pi||^2

    denom = (1.0 - nu2) * (1.0 - ni2)
    y = jnp.maximum(2.0 * d2 * pl.reciprocal(denom, approx=False), 0.0)
    # acosh(1 + y) = log1p(y + sqrt(y * (y + 2)))  — stable for y ~ 0.
    dist = jnp.log1p(y + jnp.sqrt(y * (y + 2.0)))

    bu = bu_ref[...].astype(jnp.float32)                     # (1, TB)
    bi = bi_ref[...].astype(jnp.float32)

    offset = scal_ref[0]
    lin_w = scal_ref[1]
    lin_b = scal_ref[2]

    out_ref[...] = (lin_w * (bu + bi + offset + dist) + lin_b).astype(out_ref.dtype)


def _round_up(x, m):
    return (x + m - 1) // m * m


@functools.partial(jax.jit, static_argnames=("tb",))
def poincare_mf_forward(u_idx, i_idx, params, *, tb=8192):
    """Pallas-backed PoincareMF forward. Returns scores of shape (B,)."""
    u_idx = u_idx.reshape(-1)
    i_idx = i_idx.reshape(-1)
    B = u_idx.shape[0]
    D = params["embed_user"].shape[1]
    itemsize = jnp.dtype(params["embed_user"].dtype).itemsize

    # Per-batch-lane VMEM footprint: double-buffered (vu, vi, bu, bi, out)
    # blocks plus f32 working copies of the transposed embeddings.
    bytes_per_lane = 2 * (2 * D * itemsize + 2 * itemsize + 4) + 4 * D * 4
    budget = 40 << 20                            # conservative across v5e/v6e/v7x
    tb_budget = max(128, (budget // bytes_per_lane) // 128 * 128)

    if B <= 256:
        # Tiny batch: single full-array tile ((8,128) block rule waived for
        # full-extent blocks), no padding, single grid step.
        tb_eff = B
    else:
        # >= 2 lane-aligned tiles so both v7x TensorCores get work, capped by
        # the requested tile and the VMEM budget.
        tb_eff = min(tb, tb_budget, _round_up(-(-B // 2), 128))
    b_pad = _round_up(B, tb_eff)

    # Pad the *indices* (B int32s, cheap) instead of the gathered float arrays;
    # index 0 is a safe sentinel (transform^2 keeps any real row inside the ball).
    if b_pad != B:
        u_idx = jnp.pad(u_idx, (0, b_pad - B))
        i_idx = jnp.pad(i_idx, (0, b_pad - B))

    # Gathers stay in XLA; outputs arrive already padded, no transpose pass.
    vu = params["embed_user"][u_idx]                          # (b_pad, D), native dtype
    vi = params["embed_item"][i_idx]                          # (b_pad, D)
    bu = params["embed_user_bias"][u_idx, 0].reshape(1, b_pad)
    bi = params["embed_item_bias"][i_idx, 0].reshape(1, b_pad)

    scalars = jnp.stack(
        [params["offset"].reshape(()),
         params["lin_w"].reshape(()),
         params["lin_b"].reshape(())]
    ).astype(jnp.float32)                                     # (3,) in SMEM

    need = bytes_per_lane * tb_eff + (1 << 20)
    vmem_limit = (48 << 20) if need > (16 << 20) else None    # raise past scoped defaults

    out = pl.pallas_call(
        _poincare_mf_kernel,
        out_shape=jax.ShapeDtypeStruct((1, b_pad), jnp.float32),
        grid=(b_pad // tb_eff,),
        in_specs=[
            pl.BlockSpec((tb_eff, D), lambda b: (b, 0)),
            pl.BlockSpec((tb_eff, D), lambda b: (b, 0)),
            pl.BlockSpec((1, tb_eff), lambda b: (0, b)),
            pl.BlockSpec((1, tb_eff), lambda b: (0, b)),
            pl.BlockSpec(memory_space=pltpu.MemorySpace.SMEM),
        ],
        out_specs=pl.BlockSpec((1, tb_eff), lambda b: (0, b)),
        compiler_params=pltpu.CompilerParams(
            dimension_semantics=("parallel",),
            vmem_limit_bytes=vmem_limit),
    )(vu, vi, bu, bi, scalars)

    return out[0, :B]


# ---------------------------------------------------------------------------
# Pure-JAX reference (mirrors the PyTorch module, in f32).
# ---------------------------------------------------------------------------
def _transform(x):
    n2 = jnp.sum(x * x, axis=-1, keepdims=True)
    return x / (1.0 + jnp.sqrt(1.0 + n2))


def _reference_forward(u_idx, i_idx, params):
    vu = params["embed_user"][u_idx].astype(jnp.float32)
    vi = params["embed_item"][i_idx].astype(jnp.float32)
    bu = params["embed_user_bias"][u_idx][:, 0].astype(jnp.float32)
    bi = params["embed_item_bias"][i_idx][:, 0].astype(jnp.float32)
    pu = _transform(_transform(vu))
    pi = _transform(_transform(vi))
    d2 = jnp.sum((pu - pi) ** 2, axis=-1)
    nu2 = jnp.sum(pu * pu, axis=-1)
    ni2 = jnp.sum(pi * pi, axis=-1)
    dist = jnp.arccosh(
        jnp.maximum(1.0 + 2.0 * d2 / ((1.0 - nu2) * (1.0 - ni2)), 1.0))
    s = bu + bi + params["offset"].reshape(()) + dist
    return params["lin_w"].reshape(()) * s + params["lin_b"].reshape(())


if __name__ == "__main__":
    key = jax.random.PRNGKey(0)
    n_users, n_items, n_dim = 10, 12, 32

    k1, k2, k3, k4, k5, k6, k7, k8 = jax.random.split(key, 8)
    params = {
        "embed_user": 0.1 * jax.random.normal(k1, (n_users, n_dim), jnp.float32),
        "embed_item": 0.1 * jax.random.normal(k2, (n_items, n_dim), jnp.float32),
        "embed_user_bias": 0.1 * jax.random.normal(k3, (n_users, 1), jnp.float32),
        "embed_item_bias": 0.1 * jax.random.normal(k4, (n_items, 1), jnp.float32),
        "offset": jnp.ones((1,), jnp.float32),            # torch.ones(1)
        "lin_w": 0.5 * jnp.ones((1, 1), jnp.float32),     # nn.Linear(1, 1) weight
        "lin_b": 0.1 * jnp.ones((1,), jnp.float32),       # nn.Linear(1, 1) bias
    }

    # Small batch -> single full-array tile path.
    batch = 16
    u_idx = jax.random.randint(k5, (batch,), 0, n_users)
    i_idx = jax.random.randint(k6, (batch,), 0, n_items)
    score = jax.block_until_ready(poincare_mf_forward(u_idx, i_idx, params))
    ref = _reference_forward(u_idx, i_idx, params)
    assert score.shape == (batch,)
    assert jnp.all(jnp.isfinite(score))
    assert jnp.allclose(score, ref, atol=1e-5, rtol=1e-5)

    # Larger batch -> multi-tile path (index padding + >= 2 parallel grid steps).
    batch2 = 300
    u_idx2 = jax.random.randint(k7, (batch2,), 0, n_users)
    i_idx2 = jax.random.randint(k8, (batch2,), 0, n_items)
    score2 = jax.block_until_ready(poincare_mf_forward(u_idx2, i_idx2, params))
    ref2 = _reference_forward(u_idx2, i_idx2, params)
    assert score2.shape == (batch2,)
    assert jnp.all(jnp.isfinite(score2))
    assert jnp.allclose(score2, ref2, atol=1e-5, rtol=1e-5)

    print("KERNEL_OK")
</pallas_src>

<mosaic_0001>
module attributes {stable_mosaic.version = 11 : i64} {
  func.func @_poincare_mf_kernel(%arg0: i32, %arg1: memref<16x32xf32, #tpu.memory_space<vmem>>, %arg2: memref<16x32xf32, #tpu.memory_space<vmem>>, %arg3: memref<1x16xf32, #tpu.memory_space<vmem>>, %arg4: memref<1x16xf32, #tpu.memory_space<vmem>>, %arg5: memref<3xf32, #tpu.memory_space<smem>>, %arg6: memref<1x16xf32, #tpu.memory_space<vmem>>) attributes {dimension_semantics = [#tpu.dimension_semantics<parallel>], iteration_bounds = array<i64: 1>, scalar_prefetch = 0 : i64, scratch_operands = 0 : i64, tpu.core_type = #tpu.core_type<tc>, window_params = [{transform_indices = @transform_0, window_bounds = array<i64: 16, 32>}, {transform_indices = @transform_1, window_bounds = array<i64: 16, 32>}, {transform_indices = @transform_2, window_bounds = array<i64: 1, 16>}, {transform_indices = @transform_3, window_bounds = array<i64: 1, 16>}, {transform_indices = @transform_4, window_bounds = array<i64: 3>}, {transform_indices = @transform_5, window_bounds = array<i64: 1, 16>}]} {
    %c0 = arith.constant 0 : index
    %c0_0 = arith.constant 0 : index
    %0 = vector.load %arg1[%c0, %c0_0] : memref<16x32xf32, #tpu.memory_space<vmem>>, vector<16x32xf32>
    %1 = tpu.transpose %0, [1, 0] : vector<16x32xf32> -> vector<32x16xf32>
    %c0_1 = arith.constant 0 : index
    %c0_2 = arith.constant 0 : index
    %2 = vector.load %arg2[%c0_1, %c0_2] : memref<16x32xf32, #tpu.memory_space<vmem>>, vector<16x32xf32>
    %3 = tpu.transpose %2, [1, 0] : vector<16x32xf32> -> vector<32x16xf32>
    %4 = arith.mulf %1, %1 : vector<32x16xf32>
    %cst = arith.constant dense<0.000000e+00> : vector<16xf32>
    %5 = vector.multi_reduction <add>, %4, %cst [0] : vector<32x16xf32> to vector<16xf32>
    %6 = vector.shape_cast %5 : vector<16xf32> to vector<1x16xf32>
    %7 = arith.mulf %3, %3 : vector<32x16xf32>
    %cst_3 = arith.constant dense<0.000000e+00> : vector<16xf32>
    %8 = vector.multi_reduction <add>, %7, %cst_3 [0] : vector<32x16xf32> to vector<16xf32>
    %9 = vector.shape_cast %8 : vector<16xf32> to vector<1x16xf32>
    %10 = arith.mulf %1, %3 : vector<32x16xf32>
    %cst_4 = arith.constant dense<0.000000e+00> : vector<16xf32>
    %11 = vector.multi_reduction <add>, %10, %cst_4 [0] : vector<32x16xf32> to vector<16xf32>
    %12 = vector.shape_cast %11 : vector<16xf32> to vector<1x16xf32>
    %cst_5 = arith.constant 1.000000e+00 : f32
    %13 = vector.broadcast %cst_5 : f32 to vector<1x16xf32>
    %14 = arith.addf %13, %6 : vector<1x16xf32>
    %15 = math.sqrt %14 : vector<1x16xf32>
    %cst_6 = arith.constant 1.000000e+00 : f32
    %16 = vector.broadcast %cst_6 : f32 to vector<1x16xf32>
    %17 = arith.addf %16, %15 : vector<1x16xf32>
    %18 = tpu.reciprocal %17 : vector<1x16xf32> -> vector<1x16xf32>
    %19 = arith.mulf %6, %18 : vector<1x16xf32>
    %20 = arith.mulf %19, %18 : vector<1x16xf32>
    %cst_7 = arith.constant 1.000000e+00 : f32
    %21 = vector.broadcast %cst_7 : f32 to vector<1x16xf32>
    %22 = arith.addf %21, %20 : vector<1x16xf32>
    %23 = math.sqrt %22 : vector<1x16xf32>
    %cst_8 = arith.constant 1.000000e+00 : f32
    %24 = vector.broadcast %cst_8 : f32 to vector<1x16xf32>
    %25 = arith.addf %24, %23 : vector<1x16xf32>
    %26 = tpu.reciprocal %25 : vector<1x16xf32> -> vector<1x16xf32>
    %27 = arith.mulf %18, %26 : vector<1x16xf32>
    %cst_9 = arith.constant 1.000000e+00 : f32
    %28 = vector.broadcast %cst_9 : f32 to vector<1x16xf32>
    %29 = arith.addf %28, %9 : vector<1x16xf32>
    %30 = math.sqrt %29 : vector<1x16xf32>
    %cst_10 = arith.constant 1.000000e+00 : f32
    %31 = vector.broadcast %cst_10 : f32 to vector<1x16xf32>
    %32 = arith.addf %31, %30 : vector<1x16xf32>
    %33 = tpu.reciprocal %32 : vector<1x16xf32> -> vector<1x16xf32>
    %34 = arith.mulf %9, %33 : vector<1x16xf32>
    %35 = arith.mulf %34, %33 : vector<1x16xf32>
    %cst_11 = arith.constant 1.000000e+00 : f32
    %36 = vector.broadcast %cst_11 : f32 to vector<1x16xf32>
    %37 = arith.addf %36, %35 : vector<1x16xf32>
    %38 = math.sqrt %37 : vector<1x16xf32>
    %cst_12 = arith.constant 1.000000e+00 : f32
    %39 = vector.broadcast %cst_12 : f32 to vector<1x16xf32>
    %40 = arith.addf %39, %38 : vector<1x16xf32>
    %41 = tpu.reciprocal %40 : vector<1x16xf32> -> vector<1x16xf32>
    %42 = arith.mulf %33, %41 : vector<1x16xf32>
    %43 = arith.mulf %27, %27 : vector<1x16xf32>
    %44 = arith.mulf %43, %6 : vector<1x16xf32>
    %45 = arith.mulf %42, %42 : vector<1x16xf32>
    %46 = arith.mulf %45, %9 : vector<1x16xf32>
    %47 = arith.addf %44, %46 : vector<1x16xf32>
    %48 = arith.mulf %27, %42 : vector<1x16xf32>
    %cst_13 = arith.constant 2.000000e+00 : f32
    %49 = vector.broadcast %cst_13 : f32 to vector<1x16xf32>
    %50 = arith.mulf %49, %48 : vector<1x16xf32>
    %51 = arith.mulf %50, %12 : vector<1x16xf32>
    %52 = arith.subf %47, %51 : vector<1x16xf32>
    %cst_14 = arith.constant 0.000000e+00 : f32
    %53 = vector.broadcast %cst_14 : f32 to vector<1x16xf32>
    %54 = arith.maximumf %52, %53 : vector<1x16xf32>
    %cst_15 = arith.constant 1.000000e+00 : f32
    %55 = vector.broadcast %cst_15 : f32 to vector<1x16xf32>
    %56 = arith.subf %55, %44 : vector<1x16xf32>
    %cst_16 = arith.constant 1.000000e+00 : f32
    %57 = vector.broadcast %cst_16 : f32 to vector<1x16xf32>
    %58 = arith.subf %57, %46 : vector<1x16xf32>
    %59 = arith.mulf %56, %58 : vector<1x16xf32>
    %cst_17 = arith.constant 2.000000e+00 : f32
    %60 = vector.broadcast %cst_17 : f32 to vector<1x16xf32>
    %61 = arith.mulf %60, %54 : vector<1x16xf32>
    %62 = tpu.reciprocal %59 : vector<1x16xf32> -> vector<1x16xf32>
    %63 = arith.mulf %61, %62 : vector<1x16xf32>
    %cst_18 = arith.constant 0.000000e+00 : f32
    %64 = vector.broadcast %cst_18 : f32 to vector<1x16xf32>
    %65 = arith.maximumf %63, %64 : vector<1x16xf32>
    %cst_19 = arith.constant 2.000000e+00 : f32
    %66 = vector.broadcast %cst_19 : f32 to vector<1x16xf32>
    %67 = arith.addf %65, %66 : vector<1x16xf32>
    %68 = arith.mulf %65, %67 : vector<1x16xf32>
    %69 = math.sqrt %68 : vector<1x16xf32>
    %70 = arith.addf %65, %69 : vector<1x16xf32>
    %71 = math.log1p %70 : vector<1x16xf32>
    %c0_20 = arith.constant 0 : index
    %c0_21 = arith.constant 0 : index
    %72 = vector.load %arg3[%c0_20, %c0_21] : memref<1x16xf32, #tpu.memory_space<vmem>>, vector<1x16xf32>
    %c0_22 = arith.constant 0 : index
    %c0_23 = arith.constant 0 : index
    %73 = vector.load %arg4[%c0_22, %c0_23] : memref<1x16xf32, #tpu.memory_space<vmem>>, vector<1x16xf32>
    %c0_24 = arith.constant 0 : index
    %74 = memref.load %arg5[%c0_24] : memref<3xf32, #tpu.memory_space<smem>>
    %c1 = arith.constant 1 : index
    %75 = memref.load %arg5[%c1] : memref<3xf32, #tpu.memory_space<smem>>
    %c2 = arith.constant 2 : index
    %76 = memref.load %arg5[%c2] : memref<3xf32, #tpu.memory_space<smem>>
    %77 = arith.addf %72, %73 : vector<1x16xf32>
    %78 = vector.broadcast %74 : f32 to vector<1x16xf32>
    %79 = arith.addf %77, %78 : vector<1x16xf32>
    %80 = arith.addf %79, %71 : vector<1x16xf32>
    %81 = vector.broadcast %75 : f32 to vector<1x16xf32>
    %82 = arith.mulf %81, %80 : vector<1x16xf32>
    %83 = vector.broadcast %76 : f32 to vector<1x16xf32>
    %84 = arith.addf %82, %83 : vector<1x16xf32>
    %c0_25 = arith.constant 0 : index
    %c0_26 = arith.constant 0 : index
    %85 = vector.load %arg6[%c0_25, %c0_26] : memref<1x16xf32, #tpu.memory_space<vmem>>, vector<1x16xf32>
    tpu.vector_store %arg6[%c0_25, %c0_26], %84 {strides = array<i32>} : memref<1x16xf32, #tpu.memory_space<vmem>>, vector<1x16xf32>,
    return
  }
  func.func @transform_0(%arg0: i32) -> (i32, i32) {
    %c0_i32 = arith.constant 0 : i32
    %c0_i32_0 = arith.constant 0 : i32
    return %arg0, %c0_i32 : i32, i32
  }
  func.func @transform_1(%arg0: i32) -> (i32, i32) {
    %c0_i32 = arith.constant 0 : i32
    %c0_i32_0 = arith.constant 0 : i32
    return %arg0, %c0_i32 : i32, i32
  }
  func.func @transform_2(%arg0: i32) -> (i32, i32) {
    %c0_i32 = arith.constant 0 : i32
    %c0_i32_0 = arith.constant 0 : i32
    return %c0_i32, %arg0 : i32, i32
  }
  func.func @transform_3(%arg0: i32) -> (i32, i32) {
    %c0_i32 = arith.constant 0 : i32
    %c0_i32_0 = arith.constant 0 : i32
    return %c0_i32, %arg0 : i32, i32
  }
  func.func @transform_4(%arg0: i32) -> i32 {
    %c0_i32 = arith.constant 0 : i32
    %c0_i32_0 = arith.constant 0 : i32
    return %c0_i32 : i32
  }
  func.func @transform_5(%arg0: i32) -> (i32, i32) {
    %c0_i32 = arith.constant 0 : i32
    %c0_i32_0 = arith.constant 0 : i32
    return %c0_i32, %arg0 : i32, i32
  }
}

</mosaic_0001>

<llo_original>
// kernel: poincare_mf_forward.1
$region0: #{poincare_mf_forward.1}
  #allocation0 [shape = 'u32[]', space=smem, size = 0x4, offset = 0x4, fixed_abs, tag = 'smem constant byte address 0x4 - core index']
  #allocation1 [shape = 'u32[144,128]{1,0:T(1,128)}', space=vmem, size = 0x12000, scoped, tag = 'internal scratch']
  %s0 = inlined_call_operand.vmem [shape: f32[16,32], index: 0, kind: input, shape index: {}]
  %s1 = inlined_call_operand.vmem [shape: f32[16,32], index: 1, kind: input, shape index: {}]
  %s2 = inlined_call_operand.vmem [shape: f32[1,16], index: 2, kind: input, shape index: {}]
  %s3 = inlined_call_operand.vmem [shape: f32[1,16], index: 3, kind: input, shape index: {}]
  %s4 = inlined_call_operand.vmem [shape: f32[3], index: 4, kind: input, shape index: {}]
  %s5 = inlined_call_operand.hbm [shape: f32[1,16], index: 5, kind: output, shape index: {}]
  %s6 = sld [smem:[#allocation0]]
  $region34: #{poincare_mf_forward.1} parent=0
    _
  %s8 = ssub.s32 1, %s6
  %s9 = scalar_select 0, %s8, %s6
  $region1: #{poincare_mf_forward.1} parent=0
    #allocation2 [shape = 'u8[512]{0}', space=smem, size = 0x200, scoped, tag = 'input window, operand 4, single buffered']
    #allocation3 [shape = 's32[1]{0}', space=sflag, size = 0x4, scoped, tag = 'scoped memory for poincare_mf_forward.1']
    #allocation4 [shape = 's32[1]{0}', space=sflag, size = 0x4, scoped, tag = 'scoped memory for poincare_mf_forward.1']
    #allocation5 [shape = 'u8[512]{0}', space=vmem, size = 0x400, scoped, tag = 'output window, operand 0, single buffered']
    %10 = vsyncpa [#allocation4], 0
    %11 = vsyncpa [#allocation3], 0
    // Predicated region
    $region2: #{poincare_mf_forward.1} parent=1 // pred_check
      _
    $region3: #{poincare_mf_forward.1} parent=1 // pred_check_branch
      %13 = sbr.rel (0) target = $region5
    $region4: #{poincare_mf_forward.1} parent=1 // pred_region
      _
    $region5: #{poincare_mf_forward.1} parent=1 // pred_fallthru
      _
    // Predicated region
    $region6: #{poincare_mf_forward.1} parent=1 // pred_check
      _
    $region7: #{poincare_mf_forward.1} parent=1 // pred_check_branch
      %15 = sbr.rel (0) target = $region9
    $region8: #{poincare_mf_forward.1} parent=1 // pred_region
      _
    $region9: #{poincare_mf_forward.1} parent=1 // pred_fallthru
      _
    // Predicated region
    $region10: #{poincare_mf_forward.1} parent=1 // pred_check
      _
    $region11: #{poincare_mf_forward.1} parent=1 // pred_check_branch
      %17 = sbr.rel (0) target = $region13
    $region12: #{poincare_mf_forward.1} parent=1 // pred_region
      _
    $region13: #{poincare_mf_forward.1} parent=1 // pred_fallthru
      _
    // Predicated region
    $region14: #{poincare_mf_forward.1} parent=1 // pred_check
      _
    $region15: #{poincare_mf_forward.1} parent=1 // pred_check_branch
      %19 = sbr.rel (0) target = $region17
    $region16: #{poincare_mf_forward.1} parent=1 // pred_region
      _
    $region17: #{poincare_mf_forward.1} parent=1 // pred_fallthru
      _
    // Predicated region
    $region18: #{poincare_mf_forward.1} parent=1 // pred_check
      _
    $region19: #{poincare_mf_forward.1} parent=1 // pred_check_branch
      %21 = sbr.rel (0) target = $region21
    $region20: #{poincare_mf_forward.1} parent=1 // pred_region
      %s23 = ssub.s32 16, 16
      %24 = vsyncadd [#allocation4], %s23
      %s26 = sshll.u32 %s4, 4
      %s27 = int_to_ptr.vmem [resolvable:$true] %s26
      %29 = dma.vmem_to_smem %s27, 16, [#allocation2], [#allocation4]
    $region21: #{poincare_mf_forward.1} parent=1 // pred_fallthru
      _
    // Predicated region
    $region22: #{poincare_mf_forward.1} parent=1 // pred_check
      _
    $region23: #{poincare_mf_forward.1} parent=1 // pred_check_branch
      %31 = sbr.rel (0) target = $region25
    $region24: #{poincare_mf_forward.1} parent=1 // pred_region
      %32 = dma.done [#allocation4], 16
    $region25: #{poincare_mf_forward.1} parent=1 // pred_fallthru
      _
    %33 = sfence
    %v34 = vld [vmem:[%s0] sm:$0xff]
    %v35 = vld [vmem:[%s0 + $0x8] sm:$0xff]
    %36 = vxpose.xlu0.b32.start [1/16] %v34, 128
    %37 = vxpose.xlu0.b32.cont [2/16] %v35, 128
    %38 = vxpose.xlu0.b32.cont [3/16] 0.0, 128
    %39 = vxpose.xlu0.b32.cont [4/16] 0.0, 128
    %40 = vxpose.xlu0.b32.cont [5/16] 0.0, 128
    %41 = vxpose.xlu0.b32.cont [6/16] 0.0, 128
    %42 = vxpose.xlu0.b32.cont [7/16] 0.0, 128
    %43 = vxpose.xlu0.b32.cont [8/16] 0.0, 128
    %44 = vxpose.xlu0.b32.cont [9/16] 0.0, 128
    %45 = vxpose.xlu0.b32.cont [10/16] 0.0, 128
    %46 = vxpose.xlu0.b32.cont [11/16] 0.0, 128
    %47 = vxpose.xlu0.b32.cont [12/16] 0.0, 128
    %48 = vxpose.xlu0.b32.cont [13/16] 0.0, 128
    %49 = vxpose.xlu0.b32.cont [14/16] 0.0, 128
    %50 = vxpose.xlu0.b32.cont [15/16] 0.0, 128
    %51 = vxpose.xlu0.b32.end [16/16] 0.0, 128
    %v52 = vpop.trf.xlu0
    %v53 = vpop.trf.xlu0
    %v54 = vpop.trf.xlu0
    %v55 = vpop.trf.xlu0
    %v56 = vpop.trf.xlu0
    %v57 = vpop.trf.xlu0
    %v58 = vpop.trf.xlu0
    %v59 = vpop.trf.xlu0
    %v60 = vpop.trf.xlu0
    %v61 = vpop.trf.xlu0
    %v62 = vpop.trf.xlu0
    %v63 = vpop.trf.xlu0
    %v64 = vpop.trf.xlu0
    %v65 = vpop.trf.xlu0
    %v66 = vpop.trf.xlu0
    %v67 = vpop.trf.xlu0
    %v68 = vld [vmem:[%s1] sm:$0xff]
    %v69 = vld [vmem:[%s1 + $0x8] sm:$0xff]
    %70 = vxpose.xlu0.b32.start [1/16] %v68, 128
    %71 = vxpose.xlu0.b32.cont [2/16] %v69, 128
    %72 = vxpose.xlu0.b32.cont [3/16] 0.0, 128
    %73 = vxpose.xlu0.b32.cont [4/16] 0.0, 128
    %74 = vxpose.xlu0.b32.cont [5/16] 0.0, 128
    %75 = vxpose.xlu0.b32.cont [6/16] 0.0, 128
    %76 = vxpose.xlu0.b32.cont [7/16] 0.0, 128
    %77 = vxpose.xlu0.b32.cont [8/16] 0.0, 128
    %78 = vxpose.xlu0.b32.cont [9/16] 0.0, 128
    %79 = vxpose.xlu0.b32.cont [10/16] 0.0, 128
    %80 = vxpose.xlu0.b32.cont [11/16] 0.0, 128
    %81 = vxpose.xlu0.b32.cont [12/16] 0.0, 128
    %82 = vxpose.xlu0.b32.cont [13/16] 0.0, 128
    %83 = vxpose.xlu0.b32.cont [14/16] 0.0, 128
    %84 = vxpose.xlu0.b32.cont [15/16] 0.0, 128
    %85 = vxpose.xlu0.b32.end [16/16] 0.0, 128
    %v86 = vpop.trf.xlu0
    %v87 = vpop.trf.xlu0
    %v88 = vpop.trf.xlu0
    %v89 = vpop.trf.xlu0
    %v90 = vpop.trf.xlu0
    %v91 = vpop.trf.xlu0
    %v92 = vpop.trf.xlu0
    %v93 = vpop.trf.xlu0
    %v94 = vpop.trf.xlu0
    %v95 = vpop.trf.xlu0
    %v96 = vpop.trf.xlu0
    %v97 = vpop.trf.xlu0
    %v98 = vpop.trf.xlu0
    %v99 = vpop.trf.xlu0
    %v100 = vpop.trf.xlu0
    %v101 = vpop.trf.xlu0
    %v102 = vmul.f32 %v52, %v52
    %v103 = vmul.f32 %v53, %v53
    %v104 = vmul.f32 %v54, %v54
    %v105 = vmul.f32 %v55, %v55
    %vm106 = vcmask 130048
    %v107 = vsel %vm106, %v102, 0.0
    %v108 = vsel %vm106, %v103, 0.0
    %v109 = vadd.f32 %v107, %v108
    %v110 = vsel %vm106, %v104, 0.0
    %v111 = vadd.f32 %v109, %v110
    %v112 = vsel %vm106, %v105, 0.0
    %v113 = vadd.f32 %v111, %v112
    %v114 = vrot.slane %v113, 4
    %v115 = vadd.f32 %v113, %v114
    %v116 = vrot.slane %v115, 2
    %v117 = vadd.f32 %v115, %v116
    %v118 = vrot.slane %v117, 1
    %v119 = vadd.f32 %v117, %v118
    %v120 = vmul.f32 %v86, %v86
    %v121 = vmul.f32 %v87, %v87
    %v122 = vmul.f32 %v88, %v88
    %v123 = vmul.f32 %v89, %v89
    %v124 = vsel %vm106, %v120, 0.0
    %v125 = vsel %vm106, %v121, 0.0
    %v126 = vadd.f32 %v124, %v125
    %v127 = vsel %vm106, %v122, 0.0
    %v128 = vadd.f32 %v126, %v127
    %v129 = vsel %vm106, %v123, 0.0
    %v130 = vadd.f32 %v128, %v129
    %v131 = vrot.slane %v130, 4
    %v132 = vadd.f32 %v130, %v131
    %v133 = vrot.slane %v132, 2
    %v134 = vadd.f32 %v132, %v133
    %v135 = vrot.slane %v134, 1
    %v136 = vadd.f32 %v134, %v135
    %v137 = vmul.f32 %v52, %v86
    %v138 = vmul.f32 %v53, %v87
    %v139 = vmul.f32 %v54, %v88
    %v140 = vmul.f32 %v55, %v89
    %v141 = vsel %vm106, %v137, 0.0
    %v142 = vsel %vm106, %v138, 0.0
    %v143 = vadd.f32 %v141, %v142
    %v144 = vsel %vm106, %v139, 0.0
    %v145 = vadd.f32 %v143, %v144
    %v146 = vsel %vm106, %v140, 0.0
    %v147 = vadd.f32 %v145, %v146
    %v148 = vrot.slane %v147, 4
    %v149 = vadd.f32 %v147, %v148
    %v150 = vrot.slane %v149, 2
    %v151 = vadd.f32 %v149, %v150
    %v152 = vrot.slane %v151, 1
    %v153 = vadd.f32 %v151, %v152
    %v154 = vadd.f32 %v119, 1.0
    %v155 = vrsqrt.pop %v154
    %v156 = vmul.f32 %v154, %v155
    %vm157 = vcmp.eq.f32.partialorder %v154, inf
    %v158 = vsel %vm157, %v154, %v156
    %vm159 = vcmp.eq.f32.partialorder %v154, 0.0
    %v160 = vand.u32 %v154, 2147483648
    %v161 = vsel %vm159, %v160, %v158
    %v162 = vadd.f32 %v161, 1.0
    %v163 = vrcp.pop %v162
    %v164 = vmul.f32 %v119, %v163
    %v165 = vmul.f32 %v164, %v163
    %v166 = vadd.f32 %v165, 1.0
    %v167 = vrsqrt.pop %v166
    %v168 = vmul.f32 %v166, %v167
    %vm169 = vcmp.eq.f32.partialorder %v166, inf
    %v170 = vsel %vm169, %v166, %v168
    %vm171 = vcmp.eq.f32.partialorder %v166, 0.0
    %v172 = vand.u32 %v166, 2147483648
    %v173 = vsel %vm171, %v172, %v170
    %v174 = vadd.f32 %v173, 1.0
    %v175 = vrcp.pop %v174
    %v176 = vmul.f32 %v163, %v175
    %v177 = vadd.f32 %v136, 1.0
    %v178 = vrsqrt.pop %v177
    %v179 = vmul.f32 %v177, %v178
    %vm180 = vcmp.eq.f32.partialorder %v177, inf
    %v181 = vsel %vm180, %v177, %v179
    %vm182 = vcmp.eq.f32.partialorder %v177, 0.0
    %v183 = vand.u32 %v177, 2147483648
    %v184 = vsel %vm182, %v183, %v181
    %v185 = vadd.f32 %v184, 1.0
    %v186 = vrcp.pop %v185
    %v187 = vmul.f32 %v136, %v186
    %v188 = vmul.f32 %v187, %v186
    %v189 = vadd.f32 %v188, 1.0
    %v190 = vrsqrt.pop %v189
    %v191 = vmul.f32 %v189, %v190
    %vm192 = vcmp.eq.f32.partialorder %v189, inf
    %v193 = vsel %vm192, %v189, %v191
    %vm194 = vcmp.eq.f32.partialorder %v189, 0.0
    %v195 = vand.u32 %v189, 2147483648
    %v196 = vsel %vm194, %v195, %v193
    %v197 = vadd.f32 %v196, 1.0
    %v198 = vrcp.pop %v197
    %v199 = vmul.f32 %v186, %v198
    %v200 = vmul.f32 %v176, %v176
    %v201 = vmul.f32 %v200, %v119
    %v202 = vmul.f32 %v199, %v199
    %v203 = vmul.f32 %v202, %v136
    %v204 = vadd.f32 %v201, %v203
    %v205 = vmul.f32 %v176, %v199
    %v206 = vmul.f32 %v205, 2.0
    %v207 = vmul.f32 %v206, %v153
    %v208 = vsub.f32 %v204, %v207
    %v209 = vmax.f32 %v208, 0.0
    %v210 = vsub.f32 1.0, %v201
    %v211 = vsub.f32 1.0, %v203
    %v212 = vmul.f32 %v210, %v211
    %v213 = vmul.f32 %v209, 2.0
    %v214 = vrcp.pop %v212
    %v215 = vmul.f32 %v213, %v214
    %v216 = vmax.f32 %v215, 0.0
    %v217 = vadd.f32 %v216, 2.0
    %v218 = vmul.f32 %v216, %v217
    %v219 = vrsqrt.pop %v218
    %v220 = vmul.f32 %v218, %v219
    %vm221 = vcmp.eq.f32.partialorder %v218, inf
    %v222 = vsel %vm221, %v218, %v220
    %vm223 = vcmp.eq.f32.partialorder %v218, 0.0
    %v224 = vand.u32 %v218, 2147483648
    %v225 = vsel %vm223, %v224, %v222
    %v226 = vadd.f32 %v216, %v225
    %v227 = vadd.f32 %v226, 1.0
    %v228 = vlog2.pop %v227
    %v229 = vmul.f32 %v228, 0.6931472
    %v230 = vmul.f32 -0.5, %v226
    %v231 = vadd.f32 %v230, 1.0
    %v232 = vmul.f32 %v231, %v226
    %v233 = vand.u32 2147483647, %v226
    %vm234 = vcmp.lt.f32.partialorder %v233, 0.0004427343
    %v235 = vsel %vm234, %v232, %v229
    %v236 = vld [vmem:[%s2] sm:$0x1]
    %v237 = vld [vmem:[%s3] sm:$0x1]
    %s238 = sld [smem:[#allocation2]]
    %s239 = sld [smem:[#allocation2 + $0x1]]
    %s240 = sld [smem:[#allocation2 + $0x2]]
    %v241 = vadd.f32 %v236, %v237
    %v242 = vstv %s238
    %v243 = vadd.f32 %v241, %v242
    %v244 = vadd.f32 %v243, %v235
    %v245 = vstv %s239
    %v246 = vmul.f32 %v245, %v244
    %v247 = vstv %s240
    %v248 = vadd.f32 %v246, %v247
    %vm249 = vcmask 122880
    %250 = vst.msk [vmem:[#allocation5] sm:$0x1] %vm249, %v248
    // Predicated region
    $region26: #{poincare_mf_forward.1} parent=1 // pred_check
      _
    $region27: #{poincare_mf_forward.1} parent=1 // pred_check_branch
      %252 = sbr.rel (0) target = $region29
    $region28: #{poincare_mf_forward.1} parent=1 // pred_region
      %s254 = ssub.s32 16, 16
      %255 = vsyncadd [#allocation3], %s254
      %s257 = sshll.u32 [#allocation5], 4
      %s258 = int_to_ptr.vmem [resolvable:$true] %s257
      %260 = dma.vmem_to_hbm [thread:$0]  %s258, 16, %s5, [#allocation3]
    $region29: #{poincare_mf_forward.1} parent=1 // pred_fallthru
      _
    // Predicated region
    $region30: #{poincare_mf_forward.1} parent=1 // pred_check
      _
    $region31: #{poincare_mf_forward.1} parent=1 // pred_check_branch
      %262 = sbr.rel (0) target = $region33
    $region32: #{poincare_mf_forward.1} parent=1 // pred_region
      %263 = dma.done [#allocation3], 16
    $region33: #{poincare_mf_forward.1} parent=1 // pred_fallthru
      _
    %264 = vsyncpa [#allocation3], 1
    %265 = vsyncpa [#allocation4], 1

</llo_original>
